<compile_context>
chip_gen: v7x
topology: tpu7x:2x2x1
jax: 0.10.0
libtpu: 0.0.40
codegen_flags: <defaults>
</compile_context>

<pallas_src>
import jax
import jax.numpy as jnp
from jax.experimental import pallas as pl
from jax.experimental.pallas import tpu as pltpu


def _affine_sigmoid_kernel(wb_ref, x_ref, o_ref):
    # wb_ref: (1, F+1) f32 — packed [w_eff | b_eff], constant block (resident).
    # x_ref : (tile_b, F) f32 — one batch tile in its native row-major layout.
    # o_ref : (1, tile_b) f32 — lane-dense output slab (batch on the lane axis).
    F = x_ref.shape[1]
    wb = wb_ref[...]
    w = wb[:, :F]           # (1, F)
    b = wb[:, F:F + 1]      # (1, 1)
    # Contract the minor (F) dim of both operands (q @ k^T pattern): x is consumed
    # in its native layout and the (1, tile_b) result lands with batch on lanes,
    # so the store is a full-width vst and the output DMA is dense.
    logits = jnp.einsum("of,bf->ob", w, x_ref[...],
                        preferred_element_type=jnp.float32) + b
    o_ref[...] = jax.nn.sigmoid(logits).astype(o_ref.dtype)


def _round_up(v, m):
    return (v + m - 1) // m * m


def _vmem_capacity_bytes():
    try:
        cap = int(pltpu.get_tpu_info().vmem_capacity_bytes)
        if cap >= (16 << 20):
            return cap
    except Exception:
        pass
    return 64 * 1024 * 1024          # conservative default (v7x per-TC VMEM)


def _pick_tile_b(B, F):
    """Generation-aware batch tile: as large as fits a conservative VMEM budget."""
    vmem_cap = _vmem_capacity_bytes()
    budget = int(vmem_cap * 0.4)     # leave headroom for scratch / regalloc / compiler
    # Per batch row, double-buffered: x block (lanes padded to 128) + (1, tile_b)
    # output block (sublanes padded to 8), both f32.
    per_row = 2 * 4 * _round_up(F, 128) + 2 * 4 * 8
    cap = max(128, min(64 * 1024, (budget // per_row) // 128 * 128))
    b_pad = _round_up(B, 128)
    if b_pad <= cap:
        if b_pad > 8192:
            # >= 2 tiles so ("parallel",) semantics can use both v7x TensorCores.
            return _round_up(pl.cdiv(b_pad, 2), 128)
        return b_pad
    return cap


def mlp_multi_forward(x, params, *, tile_b=None):
    """Fused eval-mode MLP forward.  x: [B, F] float32.  Returns [B, 1] float32.

    params are in PyTorch layout: w1 [H,F], b1 [H,1], w2 [H,H], b2 [H,1],
    w3 [H,1] (Linear(H,1).weight as a column), b3 [1,1].
    """
    w1, b1, w2, b2, w3, b3 = params
    B, F = x.shape
    H = w1.shape[0]
    assert w1.shape == (H, F) and b1.shape == (H, 1)
    assert w2.shape == (H, H) and b2.shape == (H, 1)
    assert w3.shape == (H, 1) and b3.shape == (1, 1)

    # Inference-time algebraic collapse (exact: no nonlinearity between the
    # linears; dropout is identity in eval mode).  Tiny matmuls, full precision.
    hp = jax.lax.Precision.HIGHEST
    w_eff = jnp.matmul(jnp.matmul(w3.T, w2, precision=hp), w1, precision=hp)            # (1, F)
    b_eff = jnp.matmul(w3.T, jnp.matmul(w2, b1, precision=hp) + b2, precision=hp) + b3  # (1, 1)
    wb = jnp.concatenate([w_eff, b_eff], axis=1).astype(jnp.float32)                    # (1, F+1)

    if tile_b is None:
        tile_b = _pick_tile_b(B, F)
    assert tile_b % 128 == 0, "tile_b must be a multiple of 128"

    num_tiles = pl.cdiv(B, tile_b)
    n_pad = num_tiles * tile_b            # padded output width: all output blocks full

    # Double-buffered per-step VMEM footprint -> per-generation vmem_limit_bytes.
    footprint = (2 * tile_b * _round_up(F, 128) * 4     # x blocks (lane-padded to 128)
                 + 2 * 8 * tile_b * 4                   # (1, tile_b) out blocks
                 + 2 * 8 * 128 * 4)                     # packed (1, F+1) weight row
    vmem_cap = _vmem_capacity_bytes()
    vmem_limit = min(max(32 << 20, footprint + (8 << 20)), vmem_cap * 3 // 4)
    vmem_limit = max(vmem_limit, footprint + (1 << 20))

    cost = pl.CostEstimate(
        flops=2 * n_pad * (F + 1),
        transcendentals=2 * n_pad,                      # sigmoid ~ exp + reciprocal
        bytes_accessed=B * F * 4 + (F + 1) * 4 + n_pad * 4,
    )

    out_slab = pl.pallas_call(
        _affine_sigmoid_kernel,
        out_shape=jax.ShapeDtypeStruct((1, n_pad), jnp.float32),
        grid_spec=pltpu.PrefetchScalarGridSpec(
            num_scalar_prefetch=0,
            grid=(num_tiles,),
            in_specs=[
                pl.BlockSpec((1, F + 1), lambda i: (0, 0)),    # packed w_eff | b_eff
                pl.BlockSpec((tile_b, F), lambda i: (i, 0)),   # x tile, native layout
            ],
            out_specs=pl.BlockSpec((1, tile_b), lambda i: (0, i)),
        ),
        compiler_params=pltpu.CompilerParams(
            dimension_semantics=("parallel",),
            vmem_limit_bytes=int(vmem_limit),
        ),
        cost_estimate=cost,
    )(wb, x)

    # Drop batch padding and restore the module's [B, 1] output shape.
    return out_slab[0, :B].reshape(B, 1)


def init_params(key, n_features, n_hidden_units):
    """Deterministic init mimicking torch.nn.Linear's U(-1/sqrt(fan_in), 1/sqrt(fan_in)).

    Weights are kept in PyTorch [out, in] layout (w3 stored as a column)."""
    F, H = n_features, n_hidden_units
    ks = jax.random.split(key, 6)

    def uniform(k, shape, fan_in):
        bound = 1.0 / jnp.sqrt(jnp.float32(fan_in))
        return jax.random.uniform(k, shape, jnp.float32, -bound, bound)

    w1 = uniform(ks[0], (H, F), F)
    b1 = uniform(ks[1], (H, 1), F)
    w2 = uniform(ks[2], (H, H), H)
    b2 = uniform(ks[3], (H, 1), H)
    w3 = uniform(ks[4], (H, 1), H)
    b3 = uniform(ks[5], (1, 1), H)
    return (w1, b1, w2, b2, w3, b3)


def mlp_multi_ref(x, params):
    """Pure-JAX f32 layer-by-layer reference (mirrors the torch module, eval mode)."""
    w1, b1, w2, b2, w3, b3 = params
    h1 = x @ w1.T + b1[:, 0]
    h2 = h1 @ w2.T + b2[:, 0]
    return jax.nn.sigmoid(h2 @ w3 + b3)


if __name__ == "__main__":
    key = jax.random.PRNGKey(0)
    k_x, k_p = jax.random.split(key)

    F, H = 32, 32  # n_features, n_hidden_units
    params = init_params(k_p, F, H)

    # B=512 : small single-tile case.
    # B=40  : ragged batch smaller than one tile (partial-block read, sliced output).
    # B=9000: >= 2-tile grid with a ragged last tile (exercises the "parallel" grid).
    for B in (512, 40, 9000):
        x = jax.random.normal(jax.random.fold_in(k_x, B), (B, F), jnp.float32)
        out = jax.block_until_ready(mlp_multi_forward(x, params))
        ref = mlp_multi_ref(x, params)
        assert out.shape == (B, 1), out.shape
        # Loose tolerance covers TPU default matmul precision in both the kernel
        # dot and the plain-JAX reference; typical error is ~1e-5.
        assert jnp.allclose(out, ref, atol=2e-2, rtol=2e-2), f"mismatch vs reference (B={B})"

    print("KERNEL_OK")
</pallas_src>

<mosaic_0001>
module attributes {stable_mosaic.version = 11 : i64} {
  func.func @_affine_sigmoid_kernel(%arg0: i32, %arg1: memref<1x33xf32, #tpu.memory_space<vmem>>, %arg2: memref<512x32xf32, #tpu.memory_space<vmem>>, %arg3: memref<1x512xf32, #tpu.memory_space<vmem>>) attributes {dimension_semantics = [#tpu.dimension_semantics<parallel>], iteration_bounds = array<i64: 1>, scalar_prefetch = 0 : i64, scratch_operands = 0 : i64, tpu.core_type = #tpu.core_type<tc>, window_params = [{pipeline_mode = #tpu.pipeline_mode<synchronous>, transform_indices = @transform_0, window_bounds = array<i64: 1, 33>}, {transform_indices = @transform_1, window_bounds = array<i64: 512, 32>}, {transform_indices = @transform_2, window_bounds = array<i64: 1, 512>}]} {
    %c0 = arith.constant 0 : index
    %c0_0 = arith.constant 0 : index
    %0 = vector.load %arg1[%c0, %c0_0] : memref<1x33xf32, #tpu.memory_space<vmem>>, vector<1x33xf32>
    %1 = vector.extract_strided_slice %0 {offsets = [0, 0], sizes = [1, 32], strides = [1, 1]} : vector<1x33xf32> to vector<1x32xf32>
    %2 = vector.extract_strided_slice %0 {offsets = [0, 32], sizes = [1, 1], strides = [1, 1]} : vector<1x33xf32> to vector<1x1xf32>
    %c0_1 = arith.constant 0 : index
    %c0_2 = arith.constant 0 : index
    %3 = vector.load %arg2[%c0_1, %c0_2] : memref<512x32xf32, #tpu.memory_space<vmem>>, vector<512x32xf32>
    "tpu.trace_start"() <{level = 10 : i32, message = "of,bf->ob"}> : () -> ()
    %cst = arith.constant dense<0.000000e+00> : vector<1x512xf32>
    %4 = tpu.matmul %1, %3, %cst {dimension_numbers = #tpu.dot_dimension_numbers<[1], [1], [0], [0], [0, 0, 1, 0], [], []>} : vector<1x32xf32>, vector<512x32xf32>, vector<1x512xf32> -> vector<1x512xf32>
    "tpu.trace_stop"() : () -> ()
    %5 = vector.broadcast %2 : vector<1x1xf32> to vector<1x512xf32>
    %6 = arith.addf %4, %5 : vector<1x512xf32>
    %7 = arith.negf %6 : vector<1x512xf32>
    %8 = math.exp %7 : vector<1x512xf32>
    %cst_3 = arith.constant 1.000000e+00 : f32
    %9 = vector.broadcast %cst_3 : f32 to vector<1x512xf32>
    %10 = arith.addf %9, %8 : vector<1x512xf32>
    %11 = arith.divf %9, %10 : vector<1x512xf32>
    %c0_4 = arith.constant 0 : index
    %c0_5 = arith.constant 0 : index
    %12 = vector.load %arg3[%c0_4, %c0_5] : memref<1x512xf32, #tpu.memory_space<vmem>>, vector<1x512xf32>
    tpu.vector_store %arg3[%c0_4, %c0_5], %11 {strides = array<i32>} : memref<1x512xf32, #tpu.memory_space<vmem>>, vector<1x512xf32>,
    return
  }
  func.func @transform_0(%arg0: i32) -> (i32, i32) {
    %c0_i32 = arith.constant 0 : i32
    %c0_i32_0 = arith.constant 0 : i32
    %c0_i32_1 = arith.constant 0 : i32
    return %c0_i32, %c0_i32_0 : i32, i32
  }
  func.func @transform_1(%arg0: i32) -> (i32, i32) {
    %c0_i32 = arith.constant 0 : i32
    %c0_i32_0 = arith.constant 0 : i32
    return %arg0, %c0_i32 : i32, i32
  }
  func.func @transform_2(%arg0: i32) -> (i32, i32) {
    %c0_i32 = arith.constant 0 : i32
    %c0_i32_0 = arith.constant 0 : i32
    return %c0_i32, %arg0 : i32, i32
  }
}

</mosaic_0001>

<llo_original>
// kernel: tpu_custom_call.1
$region0: #{tpu_custom_call.1}
  #allocation0 [shape = 'u32[]', space=smem, size = 0x4, offset = 0x4, fixed_abs, tag = 'smem constant byte address 0x4 - core index']
  #allocation1 [shape = 'u32[144,128]{1,0:T(1,128)}', space=vmem, size = 0x12000, scoped, tag = 'internal scratch']
  %s0 = inlined_call_operand.vmem [shape: f32[1,33], index: 0, kind: input, shape index: {}]
  %s1 = inlined_call_operand.vmem [shape: f32[512,32], index: 1, kind: input, shape index: {}]
  %s2 = inlined_call_operand.hbm [shape: f32[1,512], index: 2, kind: output, shape index: {}]
  %s3 = sld [smem:[#allocation0]]
  $region18: #{tpu_custom_call.1} parent=0
    _
  %s5 = ssub.s32 1, %s3
  %s6 = scalar_select 0, %s5, %s3
  $region1: #{tpu_custom_call.1} parent=0
    #allocation2 [shape = 'u8[2048]{0}', space=vmem, size = 0x800, scoped, tag = 'output window, operand 0, single buffered']
    #allocation3 [shape = 's32[1]{0}', space=sflag, size = 0x4, scoped, tag = 'scoped memory for tpu_custom_call.1']
    %7 = vsyncpa [#allocation3], 0
    // Predicated region
    $region2: #{tpu_custom_call.1} parent=1 // pred_check
      _
    $region3: #{tpu_custom_call.1} parent=1 // pred_check_branch
      %9 = sbr.rel (0) target = $region5
    $region4: #{tpu_custom_call.1} parent=1 // pred_region
      _
    $region5: #{tpu_custom_call.1} parent=1 // pred_fallthru
      _
    // Predicated region
    $region6: #{tpu_custom_call.1} parent=1 // pred_check
      _
    $region7: #{tpu_custom_call.1} parent=1 // pred_check_branch
      %11 = sbr.rel (0) target = $region9
    $region8: #{tpu_custom_call.1} parent=1 // pred_region
      _
    $region9: #{tpu_custom_call.1} parent=1 // pred_fallthru
      _
    %v12 = vld [vmem:[%s0] sm:$0x1]
    %v13 = vld [vmem:[%s1] sm:$0xff]
    %v14 = vld [vmem:[%s1 + $0x8] sm:$0xff]
    %v15 = vld [vmem:[%s1 + $0x10] sm:$0xff]
    %v16 = vld [vmem:[%s1 + $0x18] sm:$0xff]
    %v17 = vld [vmem:[%s1 + $0x20] sm:$0xff]
    %v18 = vld [vmem:[%s1 + $0x28] sm:$0xff]
    %v19 = vld [vmem:[%s1 + $0x30] sm:$0xff]
    %v20 = vld [vmem:[%s1 + $0x38] sm:$0xff]
    %v21 = vld [vmem:[%s1 + $0x40] sm:$0xff]
    %v22 = vld [vmem:[%s1 + $0x48] sm:$0xff]
    %v23 = vld [vmem:[%s1 + $0x50] sm:$0xff]
    %v24 = vld [vmem:[%s1 + $0x58] sm:$0xff]
    %v25 = vld [vmem:[%s1 + $0x60] sm:$0xff]
    %v26 = vld [vmem:[%s1 + $0x68] sm:$0xff]
    %v27 = vld [vmem:[%s1 + $0x70] sm:$0xff]
    %v28 = vld [vmem:[%s1 + $0x78] sm:$0xff]
    %v29 = vld [vmem:[%s1 + $0x80] sm:$0xff]
    %v30 = vld [vmem:[%s1 + $0x88] sm:$0xff]
    %v31 = vld [vmem:[%s1 + $0x90] sm:$0xff]
    %v32 = vld [vmem:[%s1 + $0x98] sm:$0xff]
    %v33 = vld [vmem:[%s1 + $0xa0] sm:$0xff]
    %v34 = vld [vmem:[%s1 + $0xa8] sm:$0xff]
    %v35 = vld [vmem:[%s1 + $0xb0] sm:$0xff]
    %v36 = vld [vmem:[%s1 + $0xb8] sm:$0xff]
    %v37 = vld [vmem:[%s1 + $0xc0] sm:$0xff]
    %v38 = vld [vmem:[%s1 + $0xc8] sm:$0xff]
    %v39 = vld [vmem:[%s1 + $0xd0] sm:$0xff]
    %v40 = vld [vmem:[%s1 + $0xd8] sm:$0xff]
    %v41 = vld [vmem:[%s1 + $0xe0] sm:$0xff]
    %v42 = vld [vmem:[%s1 + $0xe8] sm:$0xff]
    %v43 = vld [vmem:[%s1 + $0xf0] sm:$0xff]
    %v44 = vld [vmem:[%s1 + $0xf8] sm:$0xff]
    %v45 = vld [vmem:[%s1 + $0x100] sm:$0xff]
    %v46 = vld [vmem:[%s1 + $0x108] sm:$0xff]
    %v47 = vld [vmem:[%s1 + $0x110] sm:$0xff]
    %v48 = vld [vmem:[%s1 + $0x118] sm:$0xff]
    %v49 = vld [vmem:[%s1 + $0x120] sm:$0xff]
    %v50 = vld [vmem:[%s1 + $0x128] sm:$0xff]
    %v51 = vld [vmem:[%s1 + $0x130] sm:$0xff]
    %v52 = vld [vmem:[%s1 + $0x138] sm:$0xff]
    %v53 = vld [vmem:[%s1 + $0x140] sm:$0xff]
    %v54 = vld [vmem:[%s1 + $0x148] sm:$0xff]
    %v55 = vld [vmem:[%s1 + $0x150] sm:$0xff]
    %v56 = vld [vmem:[%s1 + $0x158] sm:$0xff]
    %v57 = vld [vmem:[%s1 + $0x160] sm:$0xff]
    %v58 = vld [vmem:[%s1 + $0x168] sm:$0xff]
    %v59 = vld [vmem:[%s1 + $0x170] sm:$0xff]
    %v60 = vld [vmem:[%s1 + $0x178] sm:$0xff]
    %v61 = vld [vmem:[%s1 + $0x180] sm:$0xff]
    %v62 = vld [vmem:[%s1 + $0x188] sm:$0xff]
    %v63 = vld [vmem:[%s1 + $0x190] sm:$0xff]
    %v64 = vld [vmem:[%s1 + $0x198] sm:$0xff]
    %v65 = vld [vmem:[%s1 + $0x1a0] sm:$0xff]
    %v66 = vld [vmem:[%s1 + $0x1a8] sm:$0xff]
    %v67 = vld [vmem:[%s1 + $0x1b0] sm:$0xff]
    %v68 = vld [vmem:[%s1 + $0x1b8] sm:$0xff]
    %v69 = vld [vmem:[%s1 + $0x1c0] sm:$0xff]
    %v70 = vld [vmem:[%s1 + $0x1c8] sm:$0xff]
    %v71 = vld [vmem:[%s1 + $0x1d0] sm:$0xff]
    %v72 = vld [vmem:[%s1 + $0x1d8] sm:$0xff]
    %v73 = vld [vmem:[%s1 + $0x1e0] sm:$0xff]
    %v74 = vld [vmem:[%s1 + $0x1e8] sm:$0xff]
    %v75 = vld [vmem:[%s1 + $0x1f0] sm:$0xff]
    %v76 = vld [vmem:[%s1 + $0x1f8] sm:$0xff]
    %78 = vset.pattern.permute.xlu0 32
    %79 = vperm.xlu0 %78, %v12
    %v80 = vpop.permute.xlu0 %79
    %v82 = vlaneseq
    %v83 = vshrl.u32 %v82, 7
    %v84 = vsub.s32 0, %v83
    %v85 = vrot.slane %v80, %v84
    %vm86 = vcmask 261120
    %v87 = vsel %vm86, %v12, 0
    %v90 = vsel %vm86, %v13, 0
    %v93 = vsel %vm86, %v14, 0
    %v96 = vsel %vm86, %v15, 0
    %v99 = vsel %vm86, %v16, 0
    %v102 = vsel %vm86, %v17, 0
    %v105 = vsel %vm86, %v18, 0
    %v108 = vsel %vm86, %v19, 0
    %v111 = vsel %vm86, %v20, 0
    %v114 = vsel %vm86, %v21, 0
    %v117 = vsel %vm86, %v22, 0
    %v120 = vsel %vm86, %v23, 0
    %v123 = vsel %vm86, %v24, 0
    %v126 = vsel %vm86, %v25, 0
    %v129 = vsel %vm86, %v26, 0
    %v132 = vsel %vm86, %v27, 0
    %v135 = vsel %vm86, %v28, 0
    %v138 = vsel %vm86, %v29, 0
    %v141 = vsel %vm86, %v30, 0
    %v144 = vsel %vm86, %v31, 0
    %v147 = vsel %vm86, %v32, 0
    %v150 = vsel %vm86, %v33, 0
    %v153 = vsel %vm86, %v34, 0
    %v156 = vsel %vm86, %v35, 0
    %v159 = vsel %vm86, %v36, 0
    %v162 = vsel %vm86, %v37, 0
    %v165 = vsel %vm86, %v38, 0
    %v168 = vsel %vm86, %v39, 0
    %v171 = vsel %vm86, %v40, 0
    %v174 = vsel %vm86, %v41, 0
    %v177 = vsel %vm86, %v42, 0
    %v180 = vsel %vm86, %v43, 0
    %v183 = vsel %vm86, %v44, 0
    %v186 = vsel %vm86, %v45, 0
    %v189 = vsel %vm86, %v46, 0
    %v192 = vsel %vm86, %v47, 0
    %v195 = vsel %vm86, %v48, 0
    %v198 = vsel %vm86, %v49, 0
    %v201 = vsel %vm86, %v50, 0
    %v204 = vsel %vm86, %v51, 0
    %v207 = vsel %vm86, %v52, 0
    %v210 = vsel %vm86, %v53, 0
    %v213 = vsel %vm86, %v54, 0
    %v216 = vsel %vm86, %v55, 0
    %v219 = vsel %vm86, %v56, 0
    %v222 = vsel %vm86, %v57, 0
    %v225 = vsel %vm86, %v58, 0
    %v228 = vsel %vm86, %v59, 0
    %v231 = vsel %vm86, %v60, 0
    %v234 = vsel %vm86, %v61, 0
    %v237 = vsel %vm86, %v62, 0
    %v240 = vsel %vm86, %v63, 0
    %v243 = vsel %vm86, %v64, 0
    %v246 = vsel %vm86, %v65, 0
    %v249 = vsel %vm86, %v66, 0
    %v252 = vsel %vm86, %v67, 0
    %v255 = vsel %vm86, %v68, 0
    %v258 = vsel %vm86, %v69, 0
    %v261 = vsel %vm86, %v70, 0
    %v264 = vsel %vm86, %v71, 0
    %v267 = vsel %vm86, %v72, 0
    %v270 = vsel %vm86, %v73, 0
    %v273 = vsel %vm86, %v74, 0
    %v276 = vsel %vm86, %v75, 0
    %v279 = vsel %vm86, %v76, 0
    %281 = vmatprep.subr.mxu0 0.0
    %282 = vmatpush1.xpose.msra.mxu0 %v90
    %283 = vmatprep.subr.mxu0 0.0
    %284 = vmatpush1.xpose.msra.mxu0 %v93
    %285 = vmatprep.subr.mxu0 0.0
    %286 = vmatpush1.xpose.msra.mxu0 %v96
    %287 = vmatprep.subr.mxu0 0.0
    %288 = vmatpush1.xpose.msra.mxu0 %v99
    %289 = vmatprep.subr.mxu0 0.0
    %290 = vmatpush1.xpose.msra.mxu0 %v102
    %291 = vmatprep.subr.mxu0 0.0
    %292 = vmatpush1.xpose.msra.mxu0 %v105
    %293 = vmatprep.subr.mxu0 0.0
    %294 = vmatpush1.xpose.msra.mxu0 %v108
    %295 = vmatprep.subr.mxu0 0.0
    %296 = vmatpush1.xpose.msra.mxu0 %v111
    %297 = vmatprep.subr.mxu0 0.0
    %298 = vmatpush1.xpose.msra.mxu0 %v114
    %299 = vmatprep.subr.mxu0 0.0
    %300 = vmatpush1.xpose.msra.mxu0 %v117
    %301 = vmatprep.subr.mxu0 0.0
    %302 = vmatpush1.xpose.msra.mxu0 %v120
    %303 = vmatprep.subr.mxu0 0.0
    %304 = vmatpush1.xpose.msra.mxu0 %v123
    %305 = vmatprep.subr.mxu0 0.0
    %306 = vmatpush1.xpose.msra.mxu0 %v126
    %307 = vmatprep.subr.mxu0 0.0
    %308 = vmatpush1.xpose.msra.mxu0 %v129
    %309 = vmatprep.subr.mxu0 0.0
    %310 = vmatpush1.xpose.msra.mxu0 %v132
    %311 = vmatprep.subr.mxu0 0.0
    %312 = vmatpush1.xpose.msra.mxu0 %v135
    %313 = vmatprep.subr.mxu0 0.0
    %314 = vmatpush1.xpose.msra.mxu0 %v138
    %315 = vmatprep.subr.mxu0 0.0
    %316 = vmatpush1.xpose.msra.mxu0 %v141
    %317 = vmatprep.subr.mxu0 0.0
    %318 = vmatpush1.xpose.msra.mxu0 %v144
    %319 = vmatprep.subr.mxu0 0.0
    %320 = vmatpush1.xpose.msra.mxu0 %v147
    %321 = vmatprep.subr.mxu0 0.0
    %322 = vmatpush1.xpose.msra.mxu0 %v150
    %323 = vmatprep.subr.mxu0 0.0
    %324 = vmatpush1.xpose.msra.mxu0 %v153
    %325 = vmatprep.subr.mxu0 0.0
    %326 = vmatpush1.xpose.msra.mxu0 %v156
    %327 = vmatprep.subr.mxu0 0.0
    %328 = vmatpush1.xpose.msra.mxu0 %v159
    %329 = vmatprep.subr.mxu0 0.0
    %330 = vmatpush1.xpose.msra.mxu0 %v162
    %331 = vmatprep.subr.mxu0 0.0
    %332 = vmatpush1.xpose.msra.mxu0 %v165
    %333 = vmatprep.subr.mxu0 0.0
    %334 = vmatpush1.xpose.msra.mxu0 %v168
    %335 = vmatprep.subr.mxu0 0.0
    %336 = vmatpush1.xpose.msra.mxu0 %v171
    %337 = vmatprep.subr.mxu0 0.0
    %338 = vmatpush1.xpose.msra.mxu0 %v174
    %339 = vmatprep.subr.mxu0 0.0
    %340 = vmatpush1.xpose.msra.mxu0 %v177
    %341 = vmatprep.subr.mxu0 0.0
    %342 = vmatpush1.xpose.msra.mxu0 %v180
    %343 = vmatprep.subr.mxu0 0.0
    %344 = vmatpush1.xpose.msra.mxu0 %v183
    %345 = vmatprep.mubr.f32.mxu0 0.0
    %346 = vmatmul.mubr.f32.gmra.mrb[0].mxu0 %v87
    %v347 = vpop.f32.mrb[0].mxu0
    %v348 = vadd.f32 %v85, %v347
    %v349 = vpop.f32.mrb[0].mxu0
    %v350 = vadd.f32 %v85, %v349
    %351 = vdwg.mxu0
    %352 = vmatprep.subr.mxu0 0.0
    %353 = vmatpush1.xpose.msra.mxu0 %v186
    %354 = vmatprep.subr.mxu0 0.0
    %355 = vmatpush1.xpose.msra.mxu0 %v189
    %356 = vmatprep.subr.mxu0 0.0
    %357 = vmatpush1.xpose.msra.mxu0 %v192
    %358 = vmatprep.subr.mxu0 0.0
    %359 = vmatpush1.xpose.msra.mxu0 %v195
    %360 = vmatprep.subr.mxu0 0.0
    %361 = vmatpush1.xpose.msra.mxu0 %v198
    %362 = vmatprep.subr.mxu0 0.0
    %363 = vmatpush1.xpose.msra.mxu0 %v201
    %364 = vmatprep.subr.mxu0 0.0
    %365 = vmatpush1.xpose.msra.mxu0 %v204
    %366 = vmatprep.subr.mxu0 0.0
    %367 = vmatpush1.xpose.msra.mxu0 %v207
    %368 = vmatprep.subr.mxu0 0.0
    %369 = vmatpush1.xpose.msra.mxu0 %v210
    %370 = vmatprep.subr.mxu0 0.0
    %371 = vmatpush1.xpose.msra.mxu0 %v213
    %372 = vmatprep.subr.mxu0 0.0
    %373 = vmatpush1.xpose.msra.mxu0 %v216
    %374 = vmatprep.subr.mxu0 0.0
    %375 = vmatpush1.xpose.msra.mxu0 %v219
    %376 = vmatprep.subr.mxu0 0.0
    %377 = vmatpush1.xpose.msra.mxu0 %v222
    %378 = vmatprep.subr.mxu0 0.0
    %379 = vmatpush1.xpose.msra.mxu0 %v225
    %380 = vmatprep.subr.mxu0 0.0
    %381 = vmatpush1.xpose.msra.mxu0 %v228
    %382 = vmatprep.subr.mxu0 0.0
    %383 = vmatpush1.xpose.msra.mxu0 %v231
    %384 = vmatprep.subr.mxu0 0.0
    %385 = vmatpush1.xpose.msra.mxu0 %v234
    %386 = vmatprep.subr.mxu0 0.0
    %387 = vmatpush1.xpose.msra.mxu0 %v237
    %388 = vmatprep.subr.mxu0 0.0
    %389 = vmatpush1.xpose.msra.mxu0 %v240
    %390 = vmatprep.subr.mxu0 0.0
    %391 = vmatpush1.xpose.msra.mxu0 %v243
    %392 = vmatprep.subr.mxu0 0.0
    %393 = vmatpush1.xpose.msra.mxu0 %v246
    %394 = vmatprep.subr.mxu0 0.0
    %395 = vmatpush1.xpose.msra.mxu0 %v249
    %396 = vmatprep.subr.mxu0 0.0
    %397 = vmatpush1.xpose.msra.mxu0 %v252
    %398 = vmatprep.subr.mxu0 0.0
    %399 = vmatpush1.xpose.msra.mxu0 %v255
    %400 = vmatprep.subr.mxu0 0.0
    %401 = vmatpush1.xpose.msra.mxu0 %v258
    %402 = vmatprep.subr.mxu0 0.0
    %403 = vmatpush1.xpose.msra.mxu0 %v261
    %404 = vmatprep.subr.mxu0 0.0
    %405 = vmatpush1.xpose.msra.mxu0 %v264
    %406 = vmatprep.subr.mxu0 0.0
    %407 = vmatpush1.xpose.msra.mxu0 %v267
    %408 = vmatprep.subr.mxu0 0.0
    %409 = vmatpush1.xpose.msra.mxu0 %v270
    %410 = vmatprep.subr.mxu0 0.0
    %411 = vmatpush1.xpose.msra.mxu0 %v273
    %412 = vmatprep.subr.mxu0 0.0
    %413 = vmatpush1.xpose.msra.mxu0 %v276
    %414 = vmatprep.subr.mxu0 0.0
    %415 = vmatpush1.xpose.msra.mxu0 %v279
    %416 = vmatprep.mubr.f32.mxu0 0.0
    %417 = vmatmul.mubr.f32.gmra.mrb[0].mxu0 %v87
    %v418 = vpop.f32.mrb[0].mxu0
    %v419 = vadd.f32 %v85, %v418
    %v420 = vpop.f32.mrb[0].mxu0
    %v421 = vadd.f32 %v85, %v420
    %422 = vdwg.mxu0
    %v423 = vxor.u32 %v348, 2147483648
    %v424 = vxor.u32 %v350, 2147483648
    %v425 = vxor.u32 %v419, 2147483648
    %v426 = vxor.u32 %v421, 2147483648
    %v427 = vmul.f32 %v423, 1.442695
    %v428 = vpow.pop %v427
    %v429 = vmul.f32 %v424, 1.442695
    %v430 = vpow.pop %v429
    %v431 = vmul.f32 %v425, 1.442695
    %v432 = vpow.pop %v431
    %v433 = vmul.f32 %v426, 1.442695
    %v434 = vpow.pop %v433
    %v435 = vadd.f32 %v428, 1.0
    %v436 = vadd.f32 %v430, 1.0
    %v437 = vadd.f32 %v432, 1.0
    %v438 = vadd.f32 %v434, 1.0
    %v439 = vrcp.pop %v435
    %v440 = vmul.f32 1.0, %v439
    %v441 = vrcp.pop %v436
    %v442 = vmul.f32 1.0, %v441
    %v443 = vrcp.pop %v437
    %v444 = vmul.f32 1.0, %v443
    %v445 = vrcp.pop %v438
    %v446 = vmul.f32 1.0, %v445
    %v451 = vcombine.low %v440, %v442
    %v452 = vcombine.low %v444, %v446
    %v454 = vunpack.c.l.s4 1966171168
    %v455 = vunpack.c.0.s8 %v454
    %v456 = vlaneseq
    %v457 = vshrl.u32 %v456, 7
    %v458 = vsub.s32 %v455, %v457
    %v459 = vrot.slane %v451, %v458
    %v461 = vunpack.c.l.s4 1966171168
    %v462 = vunpack.c.0.s8 %v461
    %v463 = vlaneseq
    %v464 = vshrl.u32 %v463, 7
    %v465 = vsub.s32 %v462, %v464
    %v466 = vrot.slane %v452, %v465
    %v467 = vcombine.low %v459, %v466
    %v469 = vunpack.c.l.s4 1966171168
    %v470 = vunpack.c.0.s8 %v469
    %v471 = vlaneseq
    %v472 = vshrl.u32 %v471, 7
    %v473 = vsub.s32 %v470, %v472
    %v474 = vrot.slane %v467, %v473
    %v476 = vlaneseq
    %vm477 = vcmp.ge.s32.totalorder %v476, 0
    %vm478 = vcmp.lt.s32.totalorder %v476, 512
    %vm479 = vmand %vm477, %vm478
    %480 = vst.msk [vmem:[#allocation2] sm:$0xf] %vm479, %v474
    // Predicated region
    $region10: #{tpu_custom_call.1} parent=1 // pred_check
      _
    $region11: #{tpu_custom_call.1} parent=1 // pred_check_branch
      %482 = sbr.rel (0) target = $region13
    $region12: #{tpu_custom_call.1} parent=1 // pred_region
      %s484 = ssub.s32 64, 64
      %485 = vsyncadd [#allocation3], %s484
      %s487 = sshll.u32 [#allocation2], 4
      %s488 = int_to_ptr.vmem [resolvable:$true] %s487
      %490 = dma.vmem_to_hbm [thread:$0]  %s488, 64, %s2, [#allocation3]
    $region13: #{tpu_custom_call.1} parent=1 // pred_fallthru
      _
    // Predicated region
    $region14: #{tpu_custom_call.1} parent=1 // pred_check
      _
    $region15: #{tpu_custom_call.1} parent=1 // pred_check_branch
      %492 = sbr.rel (0) target = $region17
    $region16: #{tpu_custom_call.1} parent=1 // pred_region
      %493 = dma.done [#allocation3], 64
    $region17: #{tpu_custom_call.1} parent=1 // pred_fallthru
      _
    %494 = vsyncpa [#allocation3], 1

</llo_original>
